<compile_context>
chip_gen: v7x
topology: tpu7x:2x2x1
jax: 0.10.0
libtpu: 0.0.40
codegen_flags: <defaults>
</compile_context>

<pallas_src>
import functools
import math

import jax
import jax.numpy as jnp
from jax.experimental import pallas as pl
from jax.experimental.pallas import tpu as pltpu


def _round_up(x, m):
    return (x + m - 1) // m * m


_GELU_C = math.sqrt(2.0 / math.pi)


def _new_gelu(h, tanh_dtype):
    """Exact OpenAI GELU on an f32 tile; tanh optionally evaluated in bf16 (EUP)."""
    # cube via two VPU muls; keeps jnp.power off the single EUP port
    t_in = _GELU_C * (h + 0.044715 * (h * h * h))
    t = jnp.tanh(t_in.astype(tanh_dtype)).astype(jnp.float32)
    return 0.5 * h * (1.0 + t)


def mlp_kernel(x_ref, wfc_ref, bfc_ref, wproj_ref, bproj_ref, o_ref, acc_ref,
               *, n_chunks, tH, tanh_dtype):
    # x_ref:     (tm, E)        matmul dtype (bf16 by default)
    # wfc_ref:   (E, H_pad)     matmul dtype   bfc_ref:   (1, H_pad)  f32
    # wproj_ref: (H_pad, E_pad) matmul dtype   bproj_ref: (1, E_pad)  f32
    # o_ref:     (tm, E_pad)    out dtype      acc_ref:   (tm, E_pad) f32 scratch
    x = x_ref[...]
    acc_ref[...] = jnp.zeros_like(acc_ref)
    # Fully-unrolled chunked hidden dim: the (tm, H) f32 intermediate never
    # materializes, and chunk k's GELU overlaps chunk k+1's MXU work.
    for k in range(n_chunks):
        lo, hi = k * tH, (k + 1) * tH
        h = jnp.dot(x, wfc_ref[:, lo:hi], preferred_element_type=jnp.float32)
        h = h + bfc_ref[:, lo:hi]                       # f32 bias add
        g = _new_gelu(h, tanh_dtype)                    # f32 epilogue
        acc_ref[...] += jnp.dot(g.astype(wproj_ref.dtype), wproj_ref[lo:hi, :],
                                preferred_element_type=jnp.float32)
    o_ref[...] = (acc_ref[...] + bproj_ref[...]).astype(o_ref.dtype)


def _probe_pipeline_mode():
    """Feature-detect BlockSpec(pipeline_mode=pl.Buffered(1)) without compiling."""
    if not hasattr(pl, "Buffered"):
        return False
    try:
        pl.BlockSpec((8, 128), lambda i: (0, 0), pipeline_mode=pl.Buffered(1))
        return True
    except (TypeError, ValueError):   # unsupported signature / buffer_count
        return False


_HAS_PIPELINE_MODE = _probe_pipeline_mode()


@functools.lru_cache(maxsize=None)
def _device_defaults():
    """(tm, vmem_limit_bytes, tanh_dtype) tuned per TPU generation."""
    kind = ""
    try:
        kind = jax.devices()[0].device_kind.lower()
    except Exception:   # pure hardware query; fall back to conservative defaults
        pass
    vmem_cap = None
    try:
        vmem_cap = int(pltpu.get_tpu_info().vmem_capacity_bytes)
    except Exception:   # older JAX: infer from device kind
        pass
    if vmem_cap is None:
        vmem_cap = (128 if ("v5" in kind or "v6" in kind) else 64) * 1024 * 1024
    # leave headroom for Mosaic internal scratch / revolving buffers:
    #   128 MiB parts (v5e/v6e) -> ~102 MiB, 64 MiB parts (v7x) -> 48 MiB
    vmem_limit = min(vmem_cap - 16 * 1024 * 1024, int(vmem_cap * 0.8))
    is_v5e = ("v5e" in kind) or ("v5 lite" in kind) or ("v5lite" in kind)
    tm = 256 if is_v5e else 512                    # v5e MXU step is already ~12us
    tanh_dtype = jnp.float32 if is_v5e else jnp.bfloat16   # v5e has no bf16 EUP
    return tm, vmem_limit, tanh_dtype


def mlp_forward(x, w_fc, b_fc, w_proj, b_proj, *, tm=None, tH=512,
                matmul_dtype=jnp.bfloat16, out_dtype=None, tanh_dtype=None,
                vmem_limit_bytes=None):
    """x: (B, T, n_embd). Weights pre-transposed: w_fc (E, 4E), w_proj (4E, E).

    Pass bf16 weights to skip the per-call cast (cache them once at init time)."""
    B, T, E = x.shape
    assert w_fc.shape[0] == E and w_proj.shape[0] == w_fc.shape[1]
    H = w_fc.shape[1]
    E_out = w_proj.shape[1]
    M = B * T
    out_dtype = x.dtype if out_dtype is None else out_dtype

    tm_def, vmem_def, tanh_def = _device_defaults()
    tm = tm_def if tm is None else tm
    vmem_limit_bytes = vmem_def if vmem_limit_bytes is None else vmem_limit_bytes
    tanh_dtype = tanh_def if tanh_dtype is None else tanh_dtype

    # --- tiling / padding ---------------------------------------------------
    sublane = 16 if jnp.dtype(matmul_dtype).itemsize == 2 else 8
    if tm > 256 and M < 4 * tm:       # keep >= 4 grid steps so each TC double-buffers
        tm = 256
    tm_eff = max(sublane, min(tm, _round_up(M, sublane)))
    E_pad = _round_up(E_out, 128)     # lane-dense output stores
    H_pad = _round_up(H, 128)
    tH_eff = H_pad                    # largest 128-multiple <= tH dividing H_pad
    for cand in range(min(tH, H_pad), 127, -128):
        if H_pad % cand == 0:
            tH_eff = cand
            break
    n_chunks = H_pad // tH_eff

    # --- VMEM budget: shrink the row tile if the resident footprint is too big
    w_item = jnp.dtype(matmul_dtype).itemsize
    w_mult = 1 if _HAS_PIPELINE_MODE else 2   # weights double-buffered w/o Buffered(1)
    w_bytes = w_mult * (E * H_pad + H_pad * E_pad) * w_item + (H_pad + E_pad) * 4

    def resident_bytes(tm_):
        return (w_bytes
                + 2 * tm_ * E * w_item                                # x double buffer
                + 2 * tm_ * E_pad * jnp.dtype(out_dtype).itemsize     # out double buffer
                + tm_ * E_pad * 4                                     # f32 accumulator
                + 2 * tm_ * tH_eff * 4)                               # live h/g chunk tiles

    while tm_eff > sublane and resident_bytes(tm_eff) > int(0.9 * vmem_limit_bytes):
        tm_eff = max(sublane, _round_up(tm_eff // 2, sublane))
    if resident_bytes(tm_eff) > vmem_limit_bytes:
        # TODO(synk): stream (E, tH)/(tH, E_pad) weight slabs via a second
        #             ("arbitrary") grid axis instead of requiring resident weights.
        raise NotImplementedError(
            "MLP weights do not fit in VMEM on this chip; weight streaming is not "
            "implemented in this kernel.")

    M_pad = _round_up(M, tm_eff)
    grid = (M_pad // tm_eff,)

    # --- operand prep ---------------------------------------------------------
    x2 = x.reshape(M, E)
    if M_pad != M:
        x2 = jnp.pad(x2, ((0, M_pad - M), (0, 0)))
    if x2.dtype != matmul_dtype:
        x2 = x2.astype(matmul_dtype)

    w_fc_c = w_fc if w_fc.dtype == matmul_dtype else w_fc.astype(matmul_dtype)
    w_proj_c = w_proj if w_proj.dtype == matmul_dtype else w_proj.astype(matmul_dtype)
    b_fc_c = b_fc.astype(jnp.float32)
    b_proj_c = b_proj.astype(jnp.float32)
    if H_pad != H:
        w_fc_c = jnp.pad(w_fc_c, ((0, 0), (0, H_pad - H)))
        w_proj_c = jnp.pad(w_proj_c, ((0, H_pad - H), (0, 0)))
        b_fc_c = jnp.pad(b_fc_c, (0, H_pad - H))
    if E_pad != E_out:
        w_proj_c = jnp.pad(w_proj_c, ((0, 0), (0, E_pad - E_out)))
        b_proj_c = jnp.pad(b_proj_c, (0, E_pad - E_out))
    b_fc2 = b_fc_c.reshape(1, H_pad)
    b_proj2 = b_proj_c.reshape(1, E_pad)

    # --- pallas_call builder --------------------------------------------------
    kernel = functools.partial(mlp_kernel, n_chunks=n_chunks, tH=tH_eff,
                               tanh_dtype=tanh_dtype)

    def build(single_buffer_weights):
        wkw = ({"pipeline_mode": pl.Buffered(1)}
               if (single_buffer_weights and _HAS_PIPELINE_MODE) else {})
        in_specs = [
            pl.BlockSpec((tm_eff, E), lambda i: (i, 0)),            # x: streamed
            pl.BlockSpec((E, H_pad), lambda i: (0, 0), **wkw),      # grid-invariant
            pl.BlockSpec((1, H_pad), lambda i: (0, 0), **wkw),
            pl.BlockSpec((H_pad, E_pad), lambda i: (0, 0), **wkw),
            pl.BlockSpec((1, E_pad), lambda i: (0, 0), **wkw),
        ]
        return pl.pallas_call(
            kernel,
            out_shape=jax.ShapeDtypeStruct((M_pad, E_pad), out_dtype),
            grid_spec=pltpu.PrefetchScalarGridSpec(
                num_scalar_prefetch=0,
                grid=grid,
                in_specs=in_specs,
                out_specs=pl.BlockSpec((tm_eff, E_pad), lambda i: (i, 0)),
                scratch_shapes=[pltpu.VMEM((tm_eff, E_pad), jnp.float32)],
            ),
            compiler_params=pltpu.CompilerParams(
                dimension_semantics=("parallel",),
                vmem_limit_bytes=int(vmem_limit_bytes),
            ),
        )

    args = (x2, w_fc_c, b_fc2, w_proj_c, b_proj2)
    if _HAS_PIPELINE_MODE:
        try:
            out = build(True)(*args)   # single-buffer invariant weights
        except (TypeError, ValueError, NotImplementedError, pltpu.LoweringException):
            # Only pipeline_mode signature/lowering rejections fall back here;
            # genuine compile/VMEM errors (XlaRuntimeError) still propagate.
            out = build(False)(*args)
    else:
        out = build(False)(*args)

    return out[:M, :E_out].reshape(B, T, E_out)


if __name__ == "__main__":
    # Small config consistent with the module: n_embd=32, hidden=4*n_embd=128.
    B, T, E = 2, 8, 32
    H = 4 * E

    key = jax.random.PRNGKey(0)
    kx, k1, k2, k3, k4 = jax.random.split(key, 5)

    # Deterministic init mimicking nn.Linear default: U(-1/sqrt(fan_in), 1/sqrt(fan_in)).
    bound_fc = 1.0 / math.sqrt(E)
    bound_proj = 1.0 / math.sqrt(H)
    # Weights stored pre-transposed as (in_features, out_features).
    w_fc = jax.random.uniform(k1, (E, H), jnp.float32, -bound_fc, bound_fc)
    b_fc = jax.random.uniform(k2, (H,), jnp.float32, -bound_fc, bound_fc)
    w_proj = jax.random.uniform(k3, (H, E), jnp.float32, -bound_proj, bound_proj)
    b_proj = jax.random.uniform(k4, (E,), jnp.float32, -bound_proj, bound_proj)
    x = jax.random.normal(kx, (B, T, E), jnp.float32)

    # One-time bf16 weight cast, cached outside the per-call path.
    w_fc_b = w_fc.astype(jnp.bfloat16)
    w_proj_b = w_proj.astype(jnp.bfloat16)

    c = math.sqrt(2.0 / math.pi)

    # --- Run 1: perf defaults (auto tanh dtype) vs. full-f32 module reference ----
    y = mlp_forward(x, w_fc_b, b_fc, w_proj_b, b_proj)
    y = jax.block_until_ready(y)
    assert y.shape == (B, T, E)

    h_f32 = x @ w_fc + b_fc
    g_f32 = 0.5 * h_f32 * (1.0 + jnp.tanh(c * (h_f32 + 0.044715 * h_f32 ** 3)))
    y_f32 = g_f32 @ w_proj + b_proj
    assert jnp.allclose(y, y_f32, atol=3e-2, rtol=3e-2)

    # --- Run 2: f32 tanh, checked tightly against a bf16-matmul-matched reference
    y2 = mlp_forward(x, w_fc_b, b_fc, w_proj_b, b_proj, tanh_dtype=jnp.float32)
    y2 = jax.block_until_ready(y2)
    assert y2.shape == (B, T, E)

    xb = x.reshape(B * T, E).astype(jnp.bfloat16)
    h_m = jnp.dot(xb, w_fc_b, preferred_element_type=jnp.float32) + b_fc
    g_m = _new_gelu(h_m, jnp.float32)
    y_m = (jnp.dot(g_m.astype(jnp.bfloat16), w_proj_b,
                   preferred_element_type=jnp.float32) + b_proj)
    y_m = y_m.astype(x.dtype).reshape(B, T, E)
    assert jnp.allclose(y2, y_m, atol=1e-3, rtol=1e-3)

    print("KERNEL_OK")
</pallas_src>

<mosaic_0001>
module attributes {stable_mosaic.version = 11 : i64} {
  func.func @mlp_kernel(%arg0: i32, %arg1: memref<16x32xbf16, #tpu.memory_space<vmem>>, %arg2: memref<32x128xbf16, #tpu.memory_space<vmem>>, %arg3: memref<1x128xf32, #tpu.memory_space<vmem>>, %arg4: memref<128x128xbf16, #tpu.memory_space<vmem>>, %arg5: memref<1x128xf32, #tpu.memory_space<vmem>>, %arg6: memref<16x128xf32, #tpu.memory_space<vmem>>, %arg7: memref<16x128xf32, #tpu.memory_space<vmem>>) attributes {dimension_semantics = [#tpu.dimension_semantics<parallel>], iteration_bounds = array<i64: 1>, scalar_prefetch = 0 : i64, scratch_operands = 1 : i64, tpu.core_type = #tpu.core_type<tc>, window_params = [{transform_indices = @transform_0, window_bounds = array<i64: 16, 32>}, {pipeline_mode = #tpu.pipeline_mode<synchronous>, transform_indices = @transform_1, window_bounds = array<i64: 32, 128>}, {pipeline_mode = #tpu.pipeline_mode<synchronous>, transform_indices = @transform_2, window_bounds = array<i64: 1, 128>}, {pipeline_mode = #tpu.pipeline_mode<synchronous>, transform_indices = @transform_3, window_bounds = array<i64: 128, 128>}, {pipeline_mode = #tpu.pipeline_mode<synchronous>, transform_indices = @transform_4, window_bounds = array<i64: 1, 128>}, {transform_indices = @transform_5, window_bounds = array<i64: 16, 128>}]} {
    %c0 = arith.constant 0 : index
    %c0_0 = arith.constant 0 : index
    %0 = vector.load %arg1[%c0, %c0_0] : memref<16x32xbf16, #tpu.memory_space<vmem>>, vector<16x32xbf16>
    %cst = arith.constant 0.000000e+00 : f32
    %1 = vector.broadcast %cst : f32 to vector<16x128xf32>
    %c0_1 = arith.constant 0 : index
    %c0_2 = arith.constant 0 : index
    %2 = vector.load %arg7[%c0_1, %c0_2] : memref<16x128xf32, #tpu.memory_space<vmem>>, vector<16x128xf32>
    tpu.vector_store %arg7[%c0_1, %c0_2], %1 {strides = array<i32>} : memref<16x128xf32, #tpu.memory_space<vmem>>, vector<16x128xf32>,
    %c0_3 = arith.constant 0 : index
    %c0_4 = arith.constant 0 : index
    %3 = vector.load %arg2[%c0_3, %c0_4] : memref<32x128xbf16, #tpu.memory_space<vmem>>, vector<32x128xbf16>
    %cst_5 = arith.constant dense<0.000000e+00> : vector<16x128xf32>
    %4 = tpu.matmul %0, %3, %cst_5 {dimension_numbers = #tpu.dot_dimension_numbers<[1], [0], [0], [1], [0, 0, 1, 1], [], []>} : vector<16x32xbf16>, vector<32x128xbf16>, vector<16x128xf32> -> vector<16x128xf32>
    %c0_6 = arith.constant 0 : index
    %c0_7 = arith.constant 0 : index
    %5 = vector.load %arg3[%c0_6, %c0_7] : memref<1x128xf32, #tpu.memory_space<vmem>>, vector<1x128xf32>
    %6 = vector.broadcast %5 : vector<1x128xf32> to vector<16x128xf32>
    %7 = arith.addf %4, %6 : vector<16x128xf32>
    %8 = arith.mulf %7, %7 : vector<16x128xf32>
    %9 = arith.mulf %8, %7 : vector<16x128xf32>
    %cst_8 = arith.constant 4.471500e-02 : f32
    %10 = vector.broadcast %cst_8 : f32 to vector<16x128xf32>
    %11 = arith.mulf %10, %9 : vector<16x128xf32>
    %12 = arith.addf %7, %11 : vector<16x128xf32>
    %cst_9 = arith.constant 0.797884583 : f32
    %13 = vector.broadcast %cst_9 : f32 to vector<16x128xf32>
    %14 = arith.mulf %13, %12 : vector<16x128xf32>
    %15 = arith.truncf %14 : vector<16x128xf32> to vector<16x128xbf16>
    %16 = math.tanh %15 : vector<16x128xbf16>
    %17 = arith.extf %16 : vector<16x128xbf16> to vector<16x128xf32>
    %cst_10 = arith.constant 5.000000e-01 : f32
    %18 = vector.broadcast %cst_10 : f32 to vector<16x128xf32>
    %19 = arith.mulf %18, %7 : vector<16x128xf32>
    %cst_11 = arith.constant 1.000000e+00 : f32
    %20 = vector.broadcast %cst_11 : f32 to vector<16x128xf32>
    %21 = arith.addf %20, %17 : vector<16x128xf32>
    %22 = arith.mulf %19, %21 : vector<16x128xf32>
    %c0_12 = arith.constant 0 : index
    %c0_13 = arith.constant 0 : index
    %23 = vector.load %arg7[%c0_12, %c0_13] : memref<16x128xf32, #tpu.memory_space<vmem>>, vector<16x128xf32>
    %24 = arith.truncf %22 : vector<16x128xf32> to vector<16x128xbf16>
    %c0_14 = arith.constant 0 : index
    %c0_15 = arith.constant 0 : index
    %25 = vector.load %arg4[%c0_14, %c0_15] : memref<128x128xbf16, #tpu.memory_space<vmem>>, vector<128x128xbf16>
    %cst_16 = arith.constant dense<0.000000e+00> : vector<16x128xf32>
    %26 = tpu.matmul %24, %25, %cst_16 {dimension_numbers = #tpu.dot_dimension_numbers<[1], [0], [0], [1], [0, 0, 1, 1], [], []>} : vector<16x128xbf16>, vector<128x128xbf16>, vector<16x128xf32> -> vector<16x128xf32>
    %27 = arith.addf %23, %26 : vector<16x128xf32>
    %c0_17 = arith.constant 0 : index
    %c0_18 = arith.constant 0 : index
    %28 = vector.load %arg7[%c0_17, %c0_18] : memref<16x128xf32, #tpu.memory_space<vmem>>, vector<16x128xf32>
    tpu.vector_store %arg7[%c0_17, %c0_18], %27 {strides = array<i32>} : memref<16x128xf32, #tpu.memory_space<vmem>>, vector<16x128xf32>,
    %c0_19 = arith.constant 0 : index
    %c0_20 = arith.constant 0 : index
    %29 = vector.load %arg7[%c0_19, %c0_20] : memref<16x128xf32, #tpu.memory_space<vmem>>, vector<16x128xf32>
    %c0_21 = arith.constant 0 : index
    %c0_22 = arith.constant 0 : index
    %30 = vector.load %arg5[%c0_21, %c0_22] : memref<1x128xf32, #tpu.memory_space<vmem>>, vector<1x128xf32>
    %31 = vector.broadcast %30 : vector<1x128xf32> to vector<16x128xf32>
    %32 = arith.addf %29, %31 : vector<16x128xf32>
    %c0_23 = arith.constant 0 : index
    %c0_24 = arith.constant 0 : index
    %33 = vector.load %arg6[%c0_23, %c0_24] : memref<16x128xf32, #tpu.memory_space<vmem>>, vector<16x128xf32>
    tpu.vector_store %arg6[%c0_23, %c0_24], %32 {strides = array<i32>} : memref<16x128xf32, #tpu.memory_space<vmem>>, vector<16x128xf32>,
    return
  }
  func.func @transform_0(%arg0: i32) -> (i32, i32) {
    %c0_i32 = arith.constant 0 : i32
    %c0_i32_0 = arith.constant 0 : i32
    return %arg0, %c0_i32 : i32, i32
  }
  func.func @transform_1(%arg0: i32) -> (i32, i32) {
    %c0_i32 = arith.constant 0 : i32
    %c0_i32_0 = arith.constant 0 : i32
    %c0_i32_1 = arith.constant 0 : i32
    return %c0_i32, %c0_i32_0 : i32, i32
  }
  func.func @transform_2(%arg0: i32) -> (i32, i32) {
    %c0_i32 = arith.constant 0 : i32
    %c0_i32_0 = arith.constant 0 : i32
    %c0_i32_1 = arith.constant 0 : i32
    return %c0_i32, %c0_i32_0 : i32, i32
  }
  func.func @transform_3(%arg0: i32) -> (i32, i32) {
    %c0_i32 = arith.constant 0 : i32
    %c0_i32_0 = arith.constant 0 : i32
    %c0_i32_1 = arith.constant 0 : i32
    return %c0_i32, %c0_i32_0 : i32, i32
  }
  func.func @transform_4(%arg0: i32) -> (i32, i32) {
    %c0_i32 = arith.constant 0 : i32
    %c0_i32_0 = arith.constant 0 : i32
    %c0_i32_1 = arith.constant 0 : i32
    return %c0_i32, %c0_i32_0 : i32, i32
  }
  func.func @transform_5(%arg0: i32) -> (i32, i32) {
    %c0_i32 = arith.constant 0 : i32
    %c0_i32_0 = arith.constant 0 : i32
    return %arg0, %c0_i32 : i32, i32
  }
}

</mosaic_0001>

<llo_original>
// kernel: tpu_custom_call.1
$region0: #{tpu_custom_call.1}
  #allocation0 [shape = 'u32[]', space=smem, size = 0x4, offset = 0x4, fixed_abs, tag = 'smem constant byte address 0x4 - core index']
  #allocation1 [shape = 'u32[144,128]{1,0:T(1,128)}', space=vmem, size = 0x12000, scoped, tag = 'internal scratch']
  #allocation2 [shape = 'f32[16,128]{1,0:T(8,128)}', space=vmem, size = 0x2000, scoped, tag = 'scratch operand']
  %s0 = inlined_call_operand.hbm [shape: bf16[16,32], index: 0, kind: input, shape index: {}]
  %s1 = inlined_call_operand.hbm [shape: bf16[32,128], index: 1, kind: input, shape index: {}]
  %s2 = inlined_call_operand.vmem [shape: f32[1,128], index: 2, kind: input, shape index: {}]
  %s3 = inlined_call_operand.hbm [shape: bf16[128,128], index: 3, kind: input, shape index: {}]
  %s4 = inlined_call_operand.vmem [shape: f32[1,128], index: 4, kind: input, shape index: {}]
  %s5 = inlined_call_operand.hbm [shape: f32[16,128], index: 5, kind: output, shape index: {}]
  %s6 = sld [smem:[#allocation0]]
  $region42: #{tpu_custom_call.1} parent=0
    _
  %s8 = ssub.s32 1, %s6
  %s9 = scalar_select 0, %s8, %s6
  $region1: #{tpu_custom_call.1} parent=0
    #allocation3 [shape = 'u8[4096]{0}', space=vmem, size = 0x1000, scoped, tag = 'input window, operand 0, single buffered']
    #allocation4 [shape = 's32[1]{0}', space=sflag, size = 0x4, scoped, tag = 'scoped memory for tpu_custom_call.1']
    #allocation5 [shape = 's32[1]{0}', space=sflag, size = 0x4, scoped, tag = 'scoped memory for tpu_custom_call.1']
    #allocation6 [shape = 'u8[8192]{0}', space=vmem, size = 0x2000, scoped, tag = 'input window, operand 1, single buffered']
    #allocation7 [shape = 's32[1]{0}', space=sflag, size = 0x4, scoped, tag = 'scoped memory for tpu_custom_call.1']
    #allocation8 [shape = 'u8[32768]{0}', space=vmem, size = 0x8000, scoped, tag = 'input window, operand 3, single buffered']
    #allocation9 [shape = 'u8[8192]{0}', space=vmem, size = 0x2000, scoped, tag = 'output window, operand 0, single buffered']
    %10 = vsyncpa [#allocation4], 0
    %11 = vsyncpa [#allocation7], 0
    %12 = vsyncpa [#allocation5], 0
    // Predicated region
    $region2: #{tpu_custom_call.1} parent=1 // pred_check
      _
    $region3: #{tpu_custom_call.1} parent=1 // pred_check_branch
      %14 = sbr.rel (0) target = $region5
    $region4: #{tpu_custom_call.1} parent=1 // pred_region
      %s16 = ssub.s32 128, 128
      %17 = vsyncadd [#allocation4], %s16
      %s18 = sshll.u32 [#allocation3], 4
      %s19 = int_to_ptr.vmem [resolvable:$true] %s18
      %24 = dma.hbm_to_vmem [thread:$0]  %s0, 128, %s19, [#allocation4], 64, 64, 4
    $region5: #{tpu_custom_call.1} parent=1 // pred_fallthru
      _
    // Predicated region
    $region6: #{tpu_custom_call.1} parent=1 // pred_check
      _
    $region7: #{tpu_custom_call.1} parent=1 // pred_check_branch
      %26 = sbr.rel (0) target = $region9
    $region8: #{tpu_custom_call.1} parent=1 // pred_region
      %s28 = ssub.s32 256, 256
      %29 = vsyncadd [#allocation7], %s28
      %s30 = sshll.u32 [#allocation6], 4
      %s31 = int_to_ptr.vmem [resolvable:$true] %s30
      %36 = dma.hbm_to_vmem [thread:$0]  %s1, 256, %s31, [#allocation7], 64, 64, 4
    $region9: #{tpu_custom_call.1} parent=1 // pred_fallthru
      _
    // Predicated region
    $region10: #{tpu_custom_call.1} parent=1 // pred_check
      _
    $region11: #{tpu_custom_call.1} parent=1 // pred_check_branch
      %38 = sbr.rel (0) target = $region13
    $region12: #{tpu_custom_call.1} parent=1 // pred_region
      _
    $region13: #{tpu_custom_call.1} parent=1 // pred_fallthru
      _
    // Predicated region
    $region14: #{tpu_custom_call.1} parent=1 // pred_check
      _
    $region15: #{tpu_custom_call.1} parent=1 // pred_check_branch
      %40 = sbr.rel (0) target = $region17
    $region16: #{tpu_custom_call.1} parent=1 // pred_region
      %s42 = ssub.s32 1024, 1024
      %43 = vsyncadd [#allocation7], %s42
      %s44 = sshll.u32 [#allocation8], 4
      %s45 = int_to_ptr.vmem [resolvable:$true] %s44
      %50 = dma.hbm_to_vmem [thread:$0]  %s3, 1024, %s45, [#allocation7], 64, 64, 4
    $region17: #{tpu_custom_call.1} parent=1 // pred_fallthru
      _
    // Predicated region
    $region18: #{tpu_custom_call.1} parent=1 // pred_check
      _
    $region19: #{tpu_custom_call.1} parent=1 // pred_check_branch
      %52 = sbr.rel (0) target = $region21
    $region20: #{tpu_custom_call.1} parent=1 // pred_region
      _
    $region21: #{tpu_custom_call.1} parent=1 // pred_fallthru
      _
    // Predicated region
    $region22: #{tpu_custom_call.1} parent=1 // pred_check
      _
    $region23: #{tpu_custom_call.1} parent=1 // pred_check_branch
      %54 = sbr.rel (0) target = $region25
    $region24: #{tpu_custom_call.1} parent=1 // pred_region
      %55 = dma.done [#allocation4], 128
    $region25: #{tpu_custom_call.1} parent=1 // pred_fallthru
      _
    // Predicated region
    $region26: #{tpu_custom_call.1} parent=1 // pred_check
      _
    $region27: #{tpu_custom_call.1} parent=1 // pred_check_branch
      %57 = sbr.rel (0) target = $region29
    $region28: #{tpu_custom_call.1} parent=1 // pred_region
      %58 = dma.done [#allocation7], 256
    $region29: #{tpu_custom_call.1} parent=1 // pred_fallthru
      _
    // Predicated region
    $region30: #{tpu_custom_call.1} parent=1 // pred_check
      _
    $region31: #{tpu_custom_call.1} parent=1 // pred_check_branch
      %60 = sbr.rel (0) target = $region33
    $region32: #{tpu_custom_call.1} parent=1 // pred_region
      %61 = dma.done [#allocation7], 1024
    $region33: #{tpu_custom_call.1} parent=1 // pred_fallthru
      _
    %v63 = vld [vmem:[#allocation3] sm:$0xf]
    %v64 = vld [vmem:[#allocation3 + $0x4] sm:$0xf]
    %65 = vst [vmem:[#allocation2] sm:$0xff] 0.0
    %66 = vst [vmem:[#allocation2 + $0x8] sm:$0xff] 0.0
    %v67 = vld [vmem:[#allocation6] sm:$0xf]
    %v68 = vld [vmem:[#allocation6 + $0x4] sm:$0xf]
    %v69 = vld [vmem:[#allocation6 + $0x8] sm:$0xf]
    %v70 = vld [vmem:[#allocation6 + $0xc] sm:$0xf]
    %v71 = vld [vmem:[%s2] sm:$0x1]
    %v73 = vlaneseq
    %v74 = vshrl.u32 %v73, 7
    %v75 = vsub.s32 0, %v74
    %v76 = vrot.slane %v71, %v75
    %v80 = vunpack.c.l.b16 %v63
    %v81 = vunpack.c.l.b16 %v64
    %v82 = vpack.c.b16 %v81, %v80
    %v87 = vunpack.c.l.b16 %v67
    %v88 = vunpack.c.l.b16 %v68
    %v89 = vunpack.c.l.b16 %v69
    %v90 = vunpack.c.l.b16 %v70
    %v91 = vpack.c.b16 %v88, %v87
    %v92 = vpack.c.b16 %v90, %v89
    %vm95 = vcmask 261120
    %v97 = vsel %vm95, %v82, 0
    %99 = vmatprep.subr.bf16.mxu0 0
    %100 = vmatpush1.bf16.msra.mxu0 %v91
    %101 = vmatprep.subr.bf16.mxu0 0
    %102 = vmatpush1.bf16.msra.mxu0 %v92
    %103 = vmatprep.subr.bf16.mxu0 0
    %104 = vmatpush1.bf16.msra.mxu0 0
    %105 = vmatprep.subr.bf16.mxu0 0
    %106 = vmatpush1.bf16.msra.mxu0 0
    %107 = vmatprep.subr.bf16.mxu0 0
    %108 = vmatpush1.bf16.msra.mxu0 0
    %109 = vmatprep.subr.bf16.mxu0 0
    %110 = vmatpush1.bf16.msra.mxu0 0
    %111 = vmatprep.subr.bf16.mxu0 0
    %112 = vmatpush1.bf16.msra.mxu0 0
    %113 = vmatprep.subr.bf16.mxu0 0
    %114 = vmatpush1.bf16.msra.mxu0 0
    %115 = vmatprep.subr.bf16.mxu0 0
    %116 = vmatpush1.bf16.msra.mxu0 0
    %117 = vmatprep.subr.bf16.mxu0 0
    %118 = vmatpush1.bf16.msra.mxu0 0
    %119 = vmatprep.subr.bf16.mxu0 0
    %120 = vmatpush1.bf16.msra.mxu0 0
    %121 = vmatprep.subr.bf16.mxu0 0
    %122 = vmatpush1.bf16.msra.mxu0 0
    %123 = vmatprep.subr.bf16.mxu0 0
    %124 = vmatpush1.bf16.msra.mxu0 0
    %125 = vmatprep.subr.bf16.mxu0 0
    %126 = vmatpush1.bf16.msra.mxu0 0
    %127 = vmatprep.subr.bf16.mxu0 0
    %128 = vmatpush1.bf16.msra.mxu0 0
    %129 = vmatprep.subr.bf16.mxu0 0
    %130 = vmatpush1.bf16.msra.mxu0 0
    %131 = vmatprep.mubr.bf16.mxu0 0
    %132 = vmatmul.mubr.bf16.gmra.mrb[0].mxu0 %v97
    %v133 = vpop.f32.mrb[0].mxu0
    %v134 = vadd.f32 %v76, %v133
    %v135 = vpop.f32.mrb[0].mxu0
    %v136 = vpop.f32.mrb[0].mxu0
    %v137 = vadd.f32 %v76, %v136
    %v138 = vpop.f32.mrb[0].mxu0
    %139 = vdwg.mxu0
    %v140 = vmul.f32 %v134, %v134
    %v141 = vmul.f32 %v137, %v137
    %v142 = vmul.f32 %v140, %v134
    %v143 = vmul.f32 %v141, %v137
    %v144 = vmul.f32 %v142, 0.044715
    %v145 = vmul.f32 %v143, 0.044715
    %v146 = vadd.f32 %v134, %v144
    %v147 = vadd.f32 %v137, %v145
    %v148 = vmul.f32 %v146, 0.7978846
    %v149 = vmul.f32 %v147, 0.7978846
    %v150 = vpack.c.bf16 %v149, %v148
    %v151 = vtanh.bf16.pop %v150
    %v152 = vunpack.c.l.bf16 %v151
    %v153 = vunpack.c.h.bf16 %v151
    %v154 = vmul.f32 %v134, 0.5
    %v155 = vmul.f32 %v137, 0.5
    %v156 = vadd.f32 %v152, 1.0
    %v157 = vadd.f32 %v153, 1.0
    %v158 = vmul.f32 %v154, %v156
    %v159 = vmul.f32 %v155, %v157
    %v160 = vld [vmem:[#allocation2] sm:$0xff]
    %v161 = vld [vmem:[#allocation2 + $0x8] sm:$0xff]
    %v162 = vpack.c.bf16 %v159, %v158
    %v163 = vld [vmem:[#allocation8] sm:$0xf]
    %v164 = vld [vmem:[#allocation8 + $0x4] sm:$0xf]
    %v165 = vld [vmem:[#allocation8 + $0x8] sm:$0xf]
    %v166 = vld [vmem:[#allocation8 + $0xc] sm:$0xf]
    %v167 = vld [vmem:[#allocation8 + $0x10] sm:$0xf]
    %v168 = vld [vmem:[#allocation8 + $0x14] sm:$0xf]
    %v169 = vld [vmem:[#allocation8 + $0x18] sm:$0xf]
    %v170 = vld [vmem:[#allocation8 + $0x1c] sm:$0xf]
    %v171 = vld [vmem:[#allocation8 + $0x20] sm:$0xf]
    %v172 = vld [vmem:[#allocation8 + $0x24] sm:$0xf]
    %v173 = vld [vmem:[#allocation8 + $0x28] sm:$0xf]
    %v174 = vld [vmem:[#allocation8 + $0x2c] sm:$0xf]
    %v175 = vld [vmem:[#allocation8 + $0x30] sm:$0xf]
    %v176 = vld [vmem:[#allocation8 + $0x34] sm:$0xf]
    %v177 = vld [vmem:[#allocation8 + $0x38] sm:$0xf]
    %v178 = vld [vmem:[#allocation8 + $0x3c] sm:$0xf]
    %v195 = vunpack.c.l.b16 %v163
    %v196 = vunpack.c.l.b16 %v164
    %v197 = vunpack.c.l.b16 %v165
    %v198 = vunpack.c.l.b16 %v166
    %v199 = vunpack.c.l.b16 %v167
    %v200 = vunpack.c.l.b16 %v168
    %v201 = vunpack.c.l.b16 %v169
    %v202 = vunpack.c.l.b16 %v170
    %v203 = vunpack.c.l.b16 %v171
    %v204 = vunpack.c.l.b16 %v172
    %v205 = vunpack.c.l.b16 %v173
    %v206 = vunpack.c.l.b16 %v174
    %v207 = vunpack.c.l.b16 %v175
    %v208 = vunpack.c.l.b16 %v176
    %v209 = vunpack.c.l.b16 %v177
    %v210 = vunpack.c.l.b16 %v178
    %v211 = vpack.c.b16 %v196, %v195
    %v212 = vpack.c.b16 %v198, %v197
    %v213 = vpack.c.b16 %v200, %v199
    %v214 = vpack.c.b16 %v202, %v201
    %v215 = vpack.c.b16 %v204, %v203
    %v216 = vpack.c.b16 %v206, %v205
    %v217 = vpack.c.b16 %v208, %v207
    %v218 = vpack.c.b16 %v210, %v209
    %227 = vmatprep.subr.bf16.mxu0 0
    %228 = vmatpush1.bf16.msra.mxu0 %v211
    %229 = vmatprep.subr.bf16.mxu0 0
    %230 = vmatpush1.bf16.msra.mxu0 %v212
    %231 = vmatprep.subr.bf16.mxu0 0
    %232 = vmatpush1.bf16.msra.mxu0 %v213
    %233 = vmatprep.subr.bf16.mxu0 0
    %234 = vmatpush1.bf16.msra.mxu0 %v214
    %235 = vmatprep.subr.bf16.mxu0 0
    %236 = vmatpush1.bf16.msra.mxu0 %v215
    %237 = vmatprep.subr.bf16.mxu0 0
    %238 = vmatpush1.bf16.msra.mxu0 %v216
    %239 = vmatprep.subr.bf16.mxu0 0
    %240 = vmatpush1.bf16.msra.mxu0 %v217
    %241 = vmatprep.subr.bf16.mxu0 0
    %242 = vmatpush1.bf16.msra.mxu0 %v218
    %243 = vmatprep.subr.bf16.mxu0 0
    %244 = vmatpush1.bf16.msra.mxu0 0
    %245 = vmatprep.subr.bf16.mxu0 0
    %246 = vmatpush1.bf16.msra.mxu0 0
    %247 = vmatprep.subr.bf16.mxu0 0
    %248 = vmatpush1.bf16.msra.mxu0 0
    %249 = vmatprep.subr.bf16.mxu0 0
    %250 = vmatpush1.bf16.msra.mxu0 0
    %251 = vmatprep.subr.bf16.mxu0 0
    %252 = vmatpush1.bf16.msra.mxu0 0
    %253 = vmatprep.subr.bf16.mxu0 0
    %254 = vmatpush1.bf16.msra.mxu0 0
    %255 = vmatprep.subr.bf16.mxu0 0
    %256 = vmatpush1.bf16.msra.mxu0 0
    %257 = vmatprep.subr.bf16.mxu0 0
    %258 = vmatpush1.bf16.msra.mxu0 0
    %259 = vmatprep.mubr.bf16.mxu0 0
    %260 = vmatmul.mubr.bf16.gmra.mrb[0].mxu0 %v162
    %v261 = vpop.f32.mrb[0].mxu0
    %v262 = vadd.f32 0.0, %v261
    %v263 = vpop.f32.mrb[0].mxu0
    %v264 = vpop.f32.mrb[0].mxu0
    %v265 = vadd.f32 0.0, %v264
    %v266 = vpop.f32.mrb[0].mxu0
    %267 = vdwg.mxu0
    %v268 = vadd.f32 %v160, %v262
    %v269 = vadd.f32 %v161, %v265
    %270 = vst [vmem:[#allocation2] sm:$0xff] %v268
    %271 = vst [vmem:[#allocation2 + $0x8] sm:$0xff] %v269
    %v272 = vld [vmem:[#allocation2] sm:$0xff]
    %v273 = vld [vmem:[#allocation2 + $0x8] sm:$0xff]
    %v274 = vld [vmem:[%s4] sm:$0x1]
    %v276 = vlaneseq
    %v277 = vshrl.u32 %v276, 7
    %v278 = vsub.s32 0, %v277
    %v279 = vrot.slane %v274, %v278
    %v281 = vadd.f32 %v272, %v279
    %v282 = vadd.f32 %v273, %v279
    %283 = vst [vmem:[#allocation9] sm:$0xff] %v281
    %284 = vst [vmem:[#allocation9 + $0x8] sm:$0xff] %v282
    // Predicated region
    $region34: #{tpu_custom_call.1} parent=1 // pred_check
      _
    $region35: #{tpu_custom_call.1} parent=1 // pred_check_branch
      %286 = sbr.rel (0) target = $region37
    $region36: #{tpu_custom_call.1} parent=1 // pred_region
      %s288 = ssub.s32 256, 256
      %289 = vsyncadd [#allocation5], %s288
      %s290 = sshll.u32 [#allocation9], 4
      %s291 = int_to_ptr.vmem [resolvable:$true] %s290
      %296 = dma.vmem_to_hbm [thread:$0]  %s291, 256, %s5, [#allocation5], 128, 128, 8
    $region37: #{tpu_custom_call.1} parent=1 // pred_fallthru
      _
    // Predicated region
    $region38: #{tpu_custom_call.1} parent=1 // pred_check
      _
    $region39: #{tpu_custom_call.1} parent=1 // pred_check_branch
      %298 = sbr.rel (0) target = $region41
    $region40: #{tpu_custom_call.1} parent=1 // pred_region
      %299 = dma.done [#allocation5], 256
    $region41: #{tpu_custom_call.1} parent=1 // pred_fallthru
      _
    %300 = vsyncpa [#allocation4], 1
    %301 = vsyncpa [#allocation7], 1
    %302 = vsyncpa [#allocation5], 1

</llo_original>
